<compile_context>
chip_gen: v5e
topology: v5e:2x2
jax: 0.10.0
libtpu: 0.0.40
codegen_flags: <defaults>
</compile_context>

<pallas_src>
import functools

import jax
import jax.numpy as jnp
from jax import lax
from jax.experimental import pallas as pl
from jax.experimental.pallas import tpu as pltpu


_LANE = 128
_SUBLANE = 8
_TARGET_TILE_BYTES = 8 * 1024 * 1024     # input bytes per grid step (~DMA-roofline tiles)


def _int_pow(x, n):
    r = x
    for _ in range(n - 1):
        r = r * x
    return r


def _lane_partial_sum(v, tk):
    """(tn, tk) -> (tn, 128) using static lane-aligned adds (pure VALU, no XLU)."""
    part = v[:, 0:_LANE]
    for g in range(1, tk // _LANE):
        part = part + v[:, g * _LANE:(g + 1) * _LANE]
    return part


def _gem_kernel(p_ref, x_ref, o_ref, *acc_refs, eps, hw, tk, kt, p_static):
    # ---- compile-time specialization of x**p and m**(1/p) -------------------
    if p_static is not None:
        p_int = int(round(p_static))
        is_int = abs(p_static - p_int) < 1e-12 and 1 <= p_int <= 8

        def powp(v):
            if is_int:
                return _int_pow(v, p_int)            # VALU only
            return jnp.exp(jnp.float32(p_static) * jnp.log(v))

        def rootp(m):
            if is_int and p_int == 1:
                return m
            if is_int and p_int == 2:
                return jnp.sqrt(m)
            return jnp.exp(jnp.log(m) * jnp.float32(1.0 / p_static))
    else:
        p = p_ref[0]                                 # learnable exponent (SMEM scalar)

        def powp(v):
            return jnp.exp(p * jnp.log(v))           # EUP exp/log

        def rootp(m):
            return jnp.exp(jnp.log(m) / p)

    last = kt - 1
    last_valid = hw - last * tk                      # valid lanes in the final reduce tile
    needs_mask = last_valid < tk                     # only possible on the multi-tile path

    x = x_ref[...].astype(jnp.float32)               # DMA'd in native dtype, cast in-kernel
    v = powp(jnp.maximum(x, eps))                    # clamp(min=eps) ** p   (x > 0)

    # ---- single reduce tile (common GeM case): no scratch, no mask ----------
    if kt == 1:
        mean = jnp.sum(v, axis=-1, keepdims=True) * jnp.float32(1.0 / hw)
        o_ref[...] = rootp(mean).astype(o_ref.dtype)
        return

    # ---- split reduction: lane-dense (tn, 128) accumulator -------------------
    acc_ref, = acc_refs
    k = pl.program_id(1)

    @pl.when(k == 0)
    def _():
        acc_ref[...] = jnp.zeros_like(acc_ref)

    if needs_mask:
        # Only the last (partial) reduce tile pays for the padding mask.
        @pl.when(k != last)
        def _():
            acc_ref[...] += _lane_partial_sum(v, tk)

        @pl.when(k == last)
        def _():
            col = lax.broadcasted_iota(jnp.int32, v.shape, 1)
            vm = jnp.where(col < last_valid, v, 0.0)
            acc_ref[...] += _lane_partial_sum(vm, tk)
    else:
        acc_ref[...] += _lane_partial_sum(v, tk)

    @pl.when(k == last)
    def _():
        total = jnp.sum(acc_ref[...], axis=-1, keepdims=True)   # single cross-lane reduce
        mean = total * jnp.float32(1.0 / hw)
        o_ref[...] = rootp(mean).astype(o_ref.dtype)


def gem_pool(x, p, eps=1e-6, *, col_tile=2048, p_static=None):
    """Pallas implementation of GeM.forward(x): (B, C, H, W) -> (B, C, 1, 1).

    p        : learnable exponent (array of shape (1,)) -- used at runtime unless
               `p_static` is given.
    p_static : optional Python float; if provided, the kernel specializes on it
               (integer p becomes pure-VALU multiplies instead of exp/log).
    """
    B, C, H, W = x.shape
    N = B * C
    HW = H * W
    itemsize = jnp.dtype(x.dtype).itemsize

    if col_tile % _LANE:
        raise ValueError("col_tile must be a multiple of 128")

    xf = x.reshape(N, HW)                            # contiguous view; no pad, no copy

    # Reduce tiling: full-dim lane block when it fits (no 128 constraint, no mask);
    # otherwise split into 128-multiple tiles and mask only the last partial one.
    if HW <= col_tile:
        tk, kt = HW, 1
    else:
        tk = col_tile
        kt = pl.cdiv(HW, tk)

    # Row tiling: aim for ~_TARGET_TILE_BYTES of input per grid step.
    rows = max(_SUBLANE, (_TARGET_TILE_BYTES // (tk * itemsize)) // _SUBLANE * _SUBLANE)
    tn = N if N <= rows else rows                    # full dim or a multiple of 8
    rt = pl.cdiv(N, tn)

    grid = (rt, kt)                                  # reduction axis last, "arbitrary"
    p_arr = jnp.asarray(p, dtype=jnp.float32).reshape((1,))

    kernel = functools.partial(
        _gem_kernel, eps=float(eps), hw=HW, tk=tk, kt=kt,
        p_static=None if p_static is None else float(p_static))

    # Explicit scoped-VMEM budget: 2 double-buffered input tiles + accumulator + slack.
    tile_bytes = tn * tk * itemsize
    acc_bytes = tn * _LANE * 4 if kt > 1 else 0
    vmem_limit = int(min(32 << 20, max(16 << 20, 2 * tile_bytes + acc_bytes + (4 << 20))))

    scratch = [pltpu.VMEM((tn, _LANE), jnp.float32)] if kt > 1 else []

    out = pl.pallas_call(
        kernel,
        out_shape=jax.ShapeDtypeStruct((N, 1), x.dtype),
        grid=grid,
        in_specs=[
            pl.BlockSpec(memory_space=pltpu.MemorySpace.SMEM),   # p (runtime scalar)
            pl.BlockSpec((tn, tk), lambda i, k: (i, k)),         # x tiles (auto-pipelined)
        ],
        out_specs=pl.BlockSpec((tn, 1), lambda i, k: (i, 0)),    # resident across k
        scratch_shapes=scratch,
        compiler_params=pltpu.CompilerParams(
            dimension_semantics=("parallel", "arbitrary"),
            vmem_limit_bytes=vmem_limit),
    )(p_arr, xf)

    return out.reshape(B, C, 1, 1)


def _reference(x, p, eps=1e-6):
    """Pure-JAX reference mirroring the PyTorch GeM forward."""
    xf = jnp.maximum(x.astype(jnp.float32), eps) ** jnp.float32(p[0])
    m = jnp.mean(xf, axis=(-2, -1), keepdims=True)
    return (m ** (1.0 / jnp.float32(p[0]))).astype(x.dtype)


if __name__ == "__main__":
    key = jax.random.PRNGKey(0)
    k1, k2 = jax.random.split(key)
    p = jnp.ones((1,), dtype=jnp.float32) * 3.0     # GeM's learnable p (init = 3)
    eps = 1e-6

    # 1) Common GeM case: single reduce tile (tk == H*W), runtime p.
    B, C, H, W = 2, 4, 16, 16
    x = jax.random.normal(k1, (B, C, H, W), dtype=jnp.float32)
    out = jax.block_until_ready(gem_pool(x, p, eps))
    ref = _reference(x, p, eps)
    assert out.shape == (B, C, 1, 1)
    assert jnp.allclose(out, ref, atol=1e-4, rtol=2e-4), "mismatch (single-tile path)"

    # 2) Static-p fast path (integer power on the VPU, no exp/log on the main pass).
    out_fast = jax.block_until_ready(gem_pool(x, p, eps, p_static=3.0))
    assert jnp.allclose(out_fast, ref, atol=1e-4, rtol=2e-4), "mismatch (static-p path)"

    # 3) Split-reduction path with a masked partial last tile (forced via small col_tile).
    B2, C2, H2, W2 = 2, 4, 15, 15                   # H*W = 225 -> tiles of 128 + masked 97
    x2 = jax.random.normal(k2, (B2, C2, H2, W2), dtype=jnp.float32)
    out2 = jax.block_until_ready(gem_pool(x2, p, eps, col_tile=128))
    ref2 = _reference(x2, p, eps)
    assert out2.shape == (B2, C2, 1, 1)
    assert jnp.allclose(out2, ref2, atol=1e-4, rtol=2e-4), "mismatch (multi-tile path)"

    print("KERNEL_OK")
</pallas_src>

<mosaic_0001>
module attributes {stable_mosaic.version = 11 : i64} {
  func.func @_gem_kernel(%arg0: i32, %arg1: i32, %arg2: memref<1xf32, #tpu.memory_space<smem>>, %arg3: memref<8x256xf32, #tpu.memory_space<vmem>>, %arg4: memref<8x1xf32, #tpu.memory_space<vmem>>) attributes {dimension_semantics = [#tpu.dimension_semantics<parallel>, #tpu.dimension_semantics<arbitrary>], iteration_bounds = array<i64: 1, 1>, scalar_prefetch = 0 : i64, scratch_operands = 0 : i64, tpu.core_type = #tpu.core_type<tc>, window_params = [{transform_indices = @transform_0, window_bounds = array<i64: 1>}, {transform_indices = @transform_1, window_bounds = array<i64: 8, 256>}, {transform_indices = @transform_2, window_bounds = array<i64: 8, 1>}]} {
    %c0 = arith.constant 0 : index
    %0 = memref.load %arg2[%c0] : memref<1xf32, #tpu.memory_space<smem>>
    %c0_0 = arith.constant 0 : index
    %c0_1 = arith.constant 0 : index
    %1 = vector.load %arg3[%c0_0, %c0_1] : memref<8x256xf32, #tpu.memory_space<vmem>>, vector<8x256xf32>
    %cst = arith.constant 9.99999997E-7 : f32
    %2 = vector.broadcast %cst : f32 to vector<8x256xf32>
    %3 = arith.maximumf %1, %2 : vector<8x256xf32>
    %4 = math.log %3 : vector<8x256xf32>
    %5 = vector.broadcast %0 : f32 to vector<8x256xf32>
    %6 = arith.mulf %5, %4 : vector<8x256xf32>
    %7 = math.exp %6 : vector<8x256xf32>
    %cst_2 = arith.constant dense<0.000000e+00> : vector<8xf32>
    %8 = vector.multi_reduction <add>, %7, %cst_2 [1] : vector<8x256xf32> to vector<8xf32>
    %9 = vector.shape_cast %8 : vector<8xf32> to vector<8x1xf32>
    %cst_3 = arith.constant 3.906250e-03 : f32
    %10 = vector.broadcast %cst_3 : f32 to vector<8x1xf32>
    %11 = arith.mulf %9, %10 : vector<8x1xf32>
    %12 = math.log %11 : vector<8x1xf32>
    %13 = vector.broadcast %0 : f32 to vector<8x1xf32>
    %14 = arith.divf %12, %13 : vector<8x1xf32>
    %15 = math.exp %14 : vector<8x1xf32>
    %c0_4 = arith.constant 0 : index
    %c0_5 = arith.constant 0 : index
    %16 = vector.load %arg4[%c0_4, %c0_5] : memref<8x1xf32, #tpu.memory_space<vmem>>, vector<8x1xf32>
    tpu.vector_store %arg4[%c0_4, %c0_5], %15 {strides = array<i32>} : memref<8x1xf32, #tpu.memory_space<vmem>>, vector<8x1xf32>,
    return
  }
  func.func @transform_0(%arg0: i32, %arg1: i32) -> i32 {
    %c0_i32 = arith.constant 0 : i32
    %c0_i32_0 = arith.constant 0 : i32
    return %c0_i32 : i32
  }
  func.func @transform_1(%arg0: i32, %arg1: i32) -> (i32, i32) {
    %c0_i32 = arith.constant 0 : i32
    return %arg0, %arg1 : i32, i32
  }
  func.func @transform_2(%arg0: i32, %arg1: i32) -> (i32, i32) {
    %c0_i32 = arith.constant 0 : i32
    %c0_i32_0 = arith.constant 0 : i32
    return %arg0, %c0_i32 : i32, i32
  }
}

</mosaic_0001>

<llo_original>
// kernel: tpu_custom_call.1
$region0: #{tpu_custom_call.1}
  #allocation0 [shape = 'u32[]', space=smem, size = 0x4, offset = 0x4, fixed_abs, tag = 'smem constant byte address 0x4 - core index']
  #allocation1 [shape = 'u32[72,128]{1,0:T(1,128)}', space=vmem, size = 0x9000, scoped, tag = 'internal scratch']
  #allocation2 [shape = 'f32[1]{0:T(128)S(6)}', space=smem, size = 0x200, scoped, tag = 'scoped memory for tpu_custom_call.1']
  %s0 = inlined_call_operand.<no memory space> [shape: f32[1], index: 0, kind: input, shape index: {}]
  %s1 = inlined_call_operand.hbm [shape: f32[8,256], index: 1, kind: input, shape index: {}]
  %s2 = inlined_call_operand.vmem [shape: f32[8,1], index: 2, kind: output, shape index: {}]
  %s3 = sld [smem:[#allocation0]]
  $region22: #{tpu_custom_call.1} parent=0
    _
  %s5 = ssub.s32 1, %s3
  %s6 = scalar_select 0, %s5, %s3
  %7 = sst [smem:[#allocation2]] %s0
  $region1: #{tpu_custom_call.1} parent=0
    #allocation3 [shape = 'u8[8192]{0}', space=vmem, size = 0x2000, scoped, tag = 'input window, operand 1, single buffered']
    #allocation4 [shape = 's32[1]{0}', space=sflag, size = 0x4, scoped, tag = 'scoped memory for tpu_custom_call.1']
    %8 = vsyncpa [#allocation4], 0
    // Predicated region
    $region2: #{tpu_custom_call.1} parent=1 // pred_check
      _
    $region3: #{tpu_custom_call.1} parent=1 // pred_check_branch
      %10 = sbr.rel (0) target = $region5
    $region4: #{tpu_custom_call.1} parent=1 // pred_region
      _
    $region5: #{tpu_custom_call.1} parent=1 // pred_fallthru
      _
    // Predicated region
    $region6: #{tpu_custom_call.1} parent=1 // pred_check
      _
    $region7: #{tpu_custom_call.1} parent=1 // pred_check_branch
      %12 = sbr.rel (0) target = $region9
    $region8: #{tpu_custom_call.1} parent=1 // pred_region
      %14 = vsyncadd [#allocation4], 0
      %s16 = sshll.u32 %s1, 4
      %s17 = int_to_ptr.hbm [resolvable:$true] %s16
      %s18 = sshll.u32 [#allocation3], 4
      %s19 = int_to_ptr.vmem [resolvable:$true] %s18
      %21 = dma.hbm_to_vmem [thread:$0]  %s17, 256, %s19, [#allocation4]
    $region9: #{tpu_custom_call.1} parent=1 // pred_fallthru
      _
    // Predicated region
    $region10: #{tpu_custom_call.1} parent=1 // pred_check
      _
    $region11: #{tpu_custom_call.1} parent=1 // pred_check_branch
      %23 = sbr.rel (0) target = $region13
    $region12: #{tpu_custom_call.1} parent=1 // pred_region
      %25 = dma.done [#allocation4], 256
    $region13: #{tpu_custom_call.1} parent=1 // pred_fallthru
      _
    %s26 = sld [smem:[#allocation2]]
    %v27 = vld [vmem:[#allocation3] sm:$0xff]
    %v28 = vld [vmem:[#allocation3 + $0x8] sm:$0xff]
    %v29 = vmax.f32 %v27, 1e-06
    %v30 = vmax.f32 %v28, 1e-06
    %v31 = vlog2.pop %v29
    %v32 = vmul.f32 %v31, 0.6931472
    %v33 = vlog2.pop %v30
    %v34 = vmul.f32 %v33, 0.6931472
    %v35 = vstv %s26
    %v36 = vmul.f32 %v35, %v32
    %v37 = vmul.f32 %v35, %v34
    %v38 = vmul.f32 %v36, 1.442695
    %v39 = vpow.pop %v38
    %v40 = vmul.f32 %v37, 1.442695
    %v41 = vpow.pop %v40
    %v42 = vadd.f32 %v39, %v41
    %43 = vadd.xlane.f32.xlu0 %v42
    %v44 = vpop.xlane.xlu0 %43
    %v45 = vmul.f32 %v44, 0.00390625
    %v46 = vlog2.pop %v45
    %v47 = vmul.f32 %v46, 0.6931472
    %v48 = vrcp.pop %v35
    %v49 = vmul.f32 %v35, %v48
    %v50 = vsub.f32 1.0, %v49
    %v51 = vmul.f32 %v48, %v50
    %v52 = vadd.f32 %v48, %v51
    %vm53 = vweird.f32 %v35
    %vm54 = vweird.f32 %v48
    %vm55 = vmor %vm53, %vm54
    %v56 = vsel %vm55, %v48, %v52
    %v57 = vand.u32 2147483647, %v35
    %vm58 = vcmp.eq.f32.partialorder %v57, 8.507059e+37
    %v59 = vand.u32 %v35, 2147483648
    %v60 = vor.u32 1.1754944e-38, %v59
    %v61 = vsel %vm58, %v60, %v56
    %v62 = vmul.f32 %v47, %v61
    %v63 = vmul.f32 %v62, 1.442695
    %v64 = vpow.pop %v63
    %vm65 = vcmask 7168
    %66 = vst.msk [vmem:[%s2] sm:$0xff] %vm65, %v64
    // Predicated region
    $region14: #{tpu_custom_call.1} parent=1 // pred_check
      _
    $region15: #{tpu_custom_call.1} parent=1 // pred_check_branch
      %68 = sbr.rel (0) target = $region17
    $region16: #{tpu_custom_call.1} parent=1 // pred_region
      _
    $region17: #{tpu_custom_call.1} parent=1 // pred_fallthru
      _
    // Predicated region
    $region18: #{tpu_custom_call.1} parent=1 // pred_check
      _
    $region19: #{tpu_custom_call.1} parent=1 // pred_check_branch
      %70 = sbr.rel (0) target = $region21
    $region20: #{tpu_custom_call.1} parent=1 // pred_region
      _
    $region21: #{tpu_custom_call.1} parent=1 // pred_fallthru
      _
    %71 = vsyncpa [#allocation4], 1

</llo_original>
